<compile_context>
chip_gen: v7x
topology: tpu7x:2x2x1
jax: 0.10.0
libtpu: 0.0.40
codegen_flags: <defaults>
</compile_context>

<pallas_src>
import jax
import jax.numpy as jnp
from jax.experimental import pallas as pl
from jax.experimental.pallas import tpu as pltpu


def _round_up(x, m):
    return ((x + m - 1) // m) * m


def actor_mlp_kernel(obs_ref, w1_ref, b1_ref, w2_ref, b2_ref, w3_ref, b3_ref, out_ref):
    """Fused 3-layer MLP on one batch tile: (Linear->ReLU)x2 -> Linear.

    Matmul inputs are bf16 (MXU native), accumulation / bias / ReLU in f32.
    Weights + biases are VMEM-resident across all grid steps (constant index_maps).
    """
    x = obs_ref[...]
    if x.dtype != jnp.bfloat16:
        x = x.astype(jnp.bfloat16)

    # Layer 1: Linear(input_size, hidden) + ReLU
    h1 = jnp.dot(x, w1_ref[...], preferred_element_type=jnp.float32) + b1_ref[...]
    h1 = jnp.maximum(h1, 0.0)

    # Layer 2: Linear(hidden, hidden) + ReLU
    h2 = jnp.dot(h1.astype(jnp.bfloat16), w2_ref[...],
                 preferred_element_type=jnp.float32) + b2_ref[...]
    h2 = jnp.maximum(h2, 0.0)

    # Layer 3: Linear(hidden, padded action dim), no activation. Output slab is
    # 128-lane wide so the store is an unmasked, lane-dense vst; stored bf16 to
    # halve HBM writeback (the dominant traffic at these shapes).
    logits = jnp.dot(h2.astype(jnp.bfloat16), w3_ref[...],
                     preferred_element_type=jnp.float32) + b3_ref[...]
    out_ref[...] = logits.astype(out_ref.dtype)


def actor_forward(obs, params, action_size, *, block_batch=1024):
    """Batch-tiled pallas_call. Weights stay resident; obs/out are pipelined.

    params = (w1, b1, w2, b2, w3_padded, b3_padded) from init_actor_params
    (last layer already lane-padded to a multiple of 128).
    """
    w1, b1, w2, b2, w3p, b3p = params
    batch, input_size = obs.shape
    out_pad = w3p.shape[1]

    # Sublane granularity: 8 rows for 4-byte obs, 16 for bf16 obs.
    sublane = 16 if obs.dtype == jnp.bfloat16 else 8

    # Tiny-batch safeguard: pad obs up to one sublane group (negligible copy).
    obs_in = obs
    if batch < sublane:
        obs_in = jnp.pad(obs, ((0, sublane - batch), (0, 0)))

    # --- batch tiling ---------------------------------------------------------
    tb = min(block_batch, _round_up(batch, sublane))
    tb = max(sublane, (tb // sublane) * sublane)
    # Ensure >= 2 grid steps for non-tiny batches so both v7x TensorCores get
    # work under dimension_semantics=("parallel",). No-op on v5e/v6e (1 TC).
    if batch >= 2 * sublane and pl.cdiv(batch, tb) < 2:
        tb = max(sublane, _round_up(pl.cdiv(batch, 2), sublane))
    num_blocks = pl.cdiv(max(batch, sublane), tb)
    out_batch = num_blocks * tb  # output allocated in full tiles; extra rows sliced off

    def resident(a):
        # Constant index_map -> block stays in VMEM across all grid iterations
        # (loaded once). VMEM note: resident blocks are double-buffered by
        # default; at hidden=32 that is a few KiB. If hidden ever grows toward
        # 4096 (bf16 w2 = 32 MiB), switch these specs to
        # pipeline_mode=pl.Buffered(1) to stay within v7x's 64 MiB VMEM.
        return pl.BlockSpec(a.shape, lambda i: (0, 0))

    out = pl.pallas_call(
        actor_mlp_kernel,
        out_shape=jax.ShapeDtypeStruct((out_batch, out_pad), jnp.bfloat16),
        grid=(num_blocks,),
        in_specs=[
            # obs tiled along batch; last partial tile may read garbage rows
            # (rows are independent, extra output rows are dropped below).
            pl.BlockSpec((tb, input_size), lambda i: (i, 0)),
            resident(w1), resident(b1),
            resident(w2), resident(b2),
            resident(w3p), resident(b3p),
        ],
        out_specs=pl.BlockSpec((tb, out_pad), lambda i: (i, 0)),
        compiler_params=pltpu.CompilerParams(
            # Batch axis is data-parallel -> shards across the 2 TCs on v7x
            # whenever the grid has >= 2 steps.
            dimension_semantics=("parallel",),
        ),
    )(obs_in, w1, b1, w2, b2, w3p, b3p)

    return out[:batch, :action_size].astype(jnp.float32)


def init_actor_params(key, input_size, hidden_state, action_size):
    """PyTorch-Linear-style init (U[-1/sqrt(fan_in), +1/sqrt(fan_in)]).

    Weights are stored (in_features, out_features) in bf16 (MXU-native inputs);
    biases are kept in f32 (added after the f32-accumulated matmul). The last
    layer is lane-padded to a multiple of 128 HERE, once, so the forward pass
    never re-materializes padded weights.
    """
    ks = jax.random.split(key, 6)

    def linear(kw, kb, fan_in, fan_out):
        bound = 1.0 / (fan_in ** 0.5)
        w = jax.random.uniform(kw, (fan_in, fan_out), jnp.float32, -bound, bound)
        b = jax.random.uniform(kb, (1, fan_out), jnp.float32, -bound, bound)
        return w.astype(jnp.bfloat16), b

    w1, b1 = linear(ks[0], ks[1], input_size, hidden_state)
    w2, b2 = linear(ks[2], ks[3], hidden_state, hidden_state)
    w3, b3 = linear(ks[4], ks[5], hidden_state, action_size)

    out_pad = _round_up(max(action_size, 128), 128)
    w3p = jnp.zeros((hidden_state, out_pad), w3.dtype).at[:, :action_size].set(w3)
    b3p = jnp.zeros((1, out_pad), b3.dtype).at[:, :action_size].set(b3)
    return (w1, b1, w2, b2, w3p, b3p)


def actor_forward_ref(obs, params, action_size):
    """Pure-JAX reference using the same bf16-input / f32-accumulate recipe."""
    w1, b1, w2, b2, w3p, b3p = params
    x = obs.astype(jnp.bfloat16)
    h1 = jnp.maximum(jnp.dot(x, w1, preferred_element_type=jnp.float32) + b1, 0.0)
    h2 = jnp.maximum(
        jnp.dot(h1.astype(jnp.bfloat16), w2, preferred_element_type=jnp.float32) + b2, 0.0)
    logits = jnp.dot(h2.astype(jnp.bfloat16), w3p, preferred_element_type=jnp.float32) + b3p
    return logits[:, :action_size]


if __name__ == "__main__":
    # Small shapes consistent with the module's __init__:
    input_size = 16
    state_size = 16      # unused by the forward pass (kept for signature parity)
    action_size = 4
    hidden_state = 32
    batch = 8

    key = jax.random.PRNGKey(0)
    k_obs, k_params = jax.random.split(key)

    obs = jax.random.normal(k_obs, (batch, input_size), dtype=jnp.float32)
    params = init_actor_params(k_params, input_size, hidden_state, action_size)

    out = actor_forward(obs, params, action_size)
    out = jax.block_until_ready(out)

    ref = actor_forward_ref(obs, params, action_size)
    assert out.shape == (batch, action_size)
    assert jnp.allclose(out, ref, atol=1e-2, rtol=1e-2), "Pallas output mismatch vs reference"

    print("KERNEL_OK")
</pallas_src>

<mosaic_0001>
module attributes {stable_mosaic.version = 11 : i64} {
  func.func @actor_mlp_kernel(%arg0: i32, %arg1: memref<8x16xf32, #tpu.memory_space<vmem>>, %arg2: memref<16x32xbf16, #tpu.memory_space<vmem>>, %arg3: memref<1x32xf32, #tpu.memory_space<vmem>>, %arg4: memref<32x32xbf16, #tpu.memory_space<vmem>>, %arg5: memref<1x32xf32, #tpu.memory_space<vmem>>, %arg6: memref<32x128xbf16, #tpu.memory_space<vmem>>, %arg7: memref<1x128xf32, #tpu.memory_space<vmem>>, %arg8: memref<8x128xbf16, #tpu.memory_space<vmem>>) attributes {dimension_semantics = [#tpu.dimension_semantics<parallel>], iteration_bounds = array<i64: 1>, scalar_prefetch = 0 : i64, scratch_operands = 0 : i64, tpu.core_type = #tpu.core_type<tc>, window_params = [{transform_indices = @transform_0, window_bounds = array<i64: 8, 16>}, {pipeline_mode = #tpu.pipeline_mode<synchronous>, transform_indices = @transform_1, window_bounds = array<i64: 16, 32>}, {pipeline_mode = #tpu.pipeline_mode<synchronous>, transform_indices = @transform_2, window_bounds = array<i64: 1, 32>}, {pipeline_mode = #tpu.pipeline_mode<synchronous>, transform_indices = @transform_3, window_bounds = array<i64: 32, 32>}, {pipeline_mode = #tpu.pipeline_mode<synchronous>, transform_indices = @transform_4, window_bounds = array<i64: 1, 32>}, {pipeline_mode = #tpu.pipeline_mode<synchronous>, transform_indices = @transform_5, window_bounds = array<i64: 32, 128>}, {pipeline_mode = #tpu.pipeline_mode<synchronous>, transform_indices = @transform_6, window_bounds = array<i64: 1, 128>}, {transform_indices = @transform_7, window_bounds = array<i64: 8, 128>}]} {
    %c0 = arith.constant 0 : index
    %c0_0 = arith.constant 0 : index
    %0 = vector.load %arg1[%c0, %c0_0] : memref<8x16xf32, #tpu.memory_space<vmem>>, vector<8x16xf32>
    %1 = arith.truncf %0 : vector<8x16xf32> to vector<8x16xbf16>
    %c0_1 = arith.constant 0 : index
    %c0_2 = arith.constant 0 : index
    %2 = vector.load %arg2[%c0_1, %c0_2] : memref<16x32xbf16, #tpu.memory_space<vmem>>, vector<16x32xbf16>
    %cst = arith.constant dense<0.000000e+00> : vector<8x32xf32>
    %3 = tpu.matmul %1, %2, %cst {dimension_numbers = #tpu.dot_dimension_numbers<[1], [0], [0], [1], [0, 0, 1, 1], [], []>} : vector<8x16xbf16>, vector<16x32xbf16>, vector<8x32xf32> -> vector<8x32xf32>
    %c0_3 = arith.constant 0 : index
    %c0_4 = arith.constant 0 : index
    %4 = vector.load %arg3[%c0_3, %c0_4] : memref<1x32xf32, #tpu.memory_space<vmem>>, vector<1x32xf32>
    %5 = vector.broadcast %4 : vector<1x32xf32> to vector<8x32xf32>
    %6 = arith.addf %3, %5 : vector<8x32xf32>
    %cst_5 = arith.constant 0.000000e+00 : f32
    %7 = vector.broadcast %cst_5 : f32 to vector<8x32xf32>
    %8 = arith.maximumf %6, %7 : vector<8x32xf32>
    %9 = arith.truncf %8 : vector<8x32xf32> to vector<8x32xbf16>
    %c0_6 = arith.constant 0 : index
    %c0_7 = arith.constant 0 : index
    %10 = vector.load %arg4[%c0_6, %c0_7] : memref<32x32xbf16, #tpu.memory_space<vmem>>, vector<32x32xbf16>
    %cst_8 = arith.constant dense<0.000000e+00> : vector<8x32xf32>
    %11 = tpu.matmul %9, %10, %cst_8 {dimension_numbers = #tpu.dot_dimension_numbers<[1], [0], [0], [1], [0, 0, 1, 1], [], []>} : vector<8x32xbf16>, vector<32x32xbf16>, vector<8x32xf32> -> vector<8x32xf32>
    %c0_9 = arith.constant 0 : index
    %c0_10 = arith.constant 0 : index
    %12 = vector.load %arg5[%c0_9, %c0_10] : memref<1x32xf32, #tpu.memory_space<vmem>>, vector<1x32xf32>
    %13 = vector.broadcast %12 : vector<1x32xf32> to vector<8x32xf32>
    %14 = arith.addf %11, %13 : vector<8x32xf32>
    %cst_11 = arith.constant 0.000000e+00 : f32
    %15 = vector.broadcast %cst_11 : f32 to vector<8x32xf32>
    %16 = arith.maximumf %14, %15 : vector<8x32xf32>
    %17 = arith.truncf %16 : vector<8x32xf32> to vector<8x32xbf16>
    %c0_12 = arith.constant 0 : index
    %c0_13 = arith.constant 0 : index
    %18 = vector.load %arg6[%c0_12, %c0_13] : memref<32x128xbf16, #tpu.memory_space<vmem>>, vector<32x128xbf16>
    %cst_14 = arith.constant dense<0.000000e+00> : vector<8x128xf32>
    %19 = tpu.matmul %17, %18, %cst_14 {dimension_numbers = #tpu.dot_dimension_numbers<[1], [0], [0], [1], [0, 0, 1, 1], [], []>} : vector<8x32xbf16>, vector<32x128xbf16>, vector<8x128xf32> -> vector<8x128xf32>
    %c0_15 = arith.constant 0 : index
    %c0_16 = arith.constant 0 : index
    %20 = vector.load %arg7[%c0_15, %c0_16] : memref<1x128xf32, #tpu.memory_space<vmem>>, vector<1x128xf32>
    %21 = vector.broadcast %20 : vector<1x128xf32> to vector<8x128xf32>
    %22 = arith.addf %19, %21 : vector<8x128xf32>
    %23 = arith.truncf %22 : vector<8x128xf32> to vector<8x128xbf16>
    %c0_17 = arith.constant 0 : index
    %c0_18 = arith.constant 0 : index
    %24 = vector.load %arg8[%c0_17, %c0_18] : memref<8x128xbf16, #tpu.memory_space<vmem>>, vector<8x128xbf16>
    tpu.vector_store %arg8[%c0_17, %c0_18], %23 {strides = array<i32>} : memref<8x128xbf16, #tpu.memory_space<vmem>>, vector<8x128xbf16>,
    return
  }
  func.func @transform_0(%arg0: i32) -> (i32, i32) {
    %c0_i32 = arith.constant 0 : i32
    %c0_i32_0 = arith.constant 0 : i32
    return %arg0, %c0_i32 : i32, i32
  }
  func.func @transform_1(%arg0: i32) -> (i32, i32) {
    %c0_i32 = arith.constant 0 : i32
    %c0_i32_0 = arith.constant 0 : i32
    %c0_i32_1 = arith.constant 0 : i32
    return %c0_i32, %c0_i32_0 : i32, i32
  }
  func.func @transform_2(%arg0: i32) -> (i32, i32) {
    %c0_i32 = arith.constant 0 : i32
    %c0_i32_0 = arith.constant 0 : i32
    %c0_i32_1 = arith.constant 0 : i32
    return %c0_i32, %c0_i32_0 : i32, i32
  }
  func.func @transform_3(%arg0: i32) -> (i32, i32) {
    %c0_i32 = arith.constant 0 : i32
    %c0_i32_0 = arith.constant 0 : i32
    %c0_i32_1 = arith.constant 0 : i32
    return %c0_i32, %c0_i32_0 : i32, i32
  }
  func.func @transform_4(%arg0: i32) -> (i32, i32) {
    %c0_i32 = arith.constant 0 : i32
    %c0_i32_0 = arith.constant 0 : i32
    %c0_i32_1 = arith.constant 0 : i32
    return %c0_i32, %c0_i32_0 : i32, i32
  }
  func.func @transform_5(%arg0: i32) -> (i32, i32) {
    %c0_i32 = arith.constant 0 : i32
    %c0_i32_0 = arith.constant 0 : i32
    %c0_i32_1 = arith.constant 0 : i32
    return %c0_i32, %c0_i32_0 : i32, i32
  }
  func.func @transform_6(%arg0: i32) -> (i32, i32) {
    %c0_i32 = arith.constant 0 : i32
    %c0_i32_0 = arith.constant 0 : i32
    %c0_i32_1 = arith.constant 0 : i32
    return %c0_i32, %c0_i32_0 : i32, i32
  }
  func.func @transform_7(%arg0: i32) -> (i32, i32) {
    %c0_i32 = arith.constant 0 : i32
    %c0_i32_0 = arith.constant 0 : i32
    return %arg0, %c0_i32 : i32, i32
  }
}

</mosaic_0001>

<llo_original>
// kernel: tpu_custom_call.1
$region0: #{tpu_custom_call.1}
  #allocation0 [shape = 'u32[]', space=smem, size = 0x4, offset = 0x4, fixed_abs, tag = 'smem constant byte address 0x4 - core index']
  #allocation1 [shape = 'u32[144,128]{1,0:T(1,128)}', space=vmem, size = 0x12000, scoped, tag = 'internal scratch']
  %s0 = inlined_call_operand.hbm [shape: f32[8,16], index: 0, kind: input, shape index: {}]
  %s1 = inlined_call_operand.hbm [shape: bf16[16,32], index: 1, kind: input, shape index: {}]
  %s2 = inlined_call_operand.vmem [shape: f32[1,32], index: 2, kind: input, shape index: {}]
  %s3 = inlined_call_operand.hbm [shape: bf16[32,32], index: 3, kind: input, shape index: {}]
  %s4 = inlined_call_operand.vmem [shape: f32[1,32], index: 4, kind: input, shape index: {}]
  %s5 = inlined_call_operand.vmem [shape: bf16[32,128], index: 5, kind: input, shape index: {}]
  %s6 = inlined_call_operand.vmem [shape: f32[1,128], index: 6, kind: input, shape index: {}]
  %s7 = inlined_call_operand.hbm [shape: bf16[8,128], index: 7, kind: output, shape index: {}]
  %s8 = sld [smem:[#allocation0]]
  $region50: #{tpu_custom_call.1} parent=0
    _
  %s10 = ssub.s32 1, %s8
  %s11 = scalar_select 0, %s10, %s8
  $region1: #{tpu_custom_call.1} parent=0
    #allocation2 [shape = 'u8[4096]{0}', space=vmem, size = 0x1000, scoped, tag = 'input window, operand 0, single buffered']
    #allocation3 [shape = 's32[1]{0}', space=sflag, size = 0x4, scoped, tag = 'scoped memory for tpu_custom_call.1']
    #allocation4 [shape = 's32[1]{0}', space=sflag, size = 0x4, scoped, tag = 'scoped memory for tpu_custom_call.1']
    #allocation5 [shape = 'u8[4096]{0}', space=vmem, size = 0x1000, scoped, tag = 'input window, operand 1, single buffered']
    #allocation6 [shape = 's32[1]{0}', space=sflag, size = 0x4, scoped, tag = 'scoped memory for tpu_custom_call.1']
    #allocation7 [shape = 'u8[8192]{0}', space=vmem, size = 0x2000, scoped, tag = 'input window, operand 3, single buffered']
    #allocation8 [shape = 'u8[2048]{0}', space=vmem, size = 0x800, scoped, tag = 'output window, operand 0, single buffered']
    %12 = vsyncpa [#allocation3], 0
    %13 = vsyncpa [#allocation6], 0
    %14 = vsyncpa [#allocation4], 0
    // Predicated region
    $region2: #{tpu_custom_call.1} parent=1 // pred_check
      _
    $region3: #{tpu_custom_call.1} parent=1 // pred_check_branch
      %16 = sbr.rel (0) target = $region5
    $region4: #{tpu_custom_call.1} parent=1 // pred_region
      %s18 = ssub.s32 128, 128
      %19 = vsyncadd [#allocation3], %s18
      %s21 = sshll.u32 [#allocation2], 4
      %s22 = int_to_ptr.vmem [resolvable:$true] %s21
      %24 = dma.hbm_to_vmem [thread:$0]  %s0, 128, %s22, [#allocation3]
    $region5: #{tpu_custom_call.1} parent=1 // pred_fallthru
      _
    // Predicated region
    $region6: #{tpu_custom_call.1} parent=1 // pred_check
      _
    $region7: #{tpu_custom_call.1} parent=1 // pred_check_branch
      %26 = sbr.rel (0) target = $region9
    $region8: #{tpu_custom_call.1} parent=1 // pred_region
      %s28 = ssub.s32 128, 128
      %29 = vsyncadd [#allocation6], %s28
      %s30 = sshll.u32 [#allocation5], 4
      %s31 = int_to_ptr.vmem [resolvable:$true] %s30
      %36 = dma.hbm_to_vmem [thread:$0]  %s1, 128, %s31, [#allocation6], 64, 64, 4
    $region9: #{tpu_custom_call.1} parent=1 // pred_fallthru
      _
    // Predicated region
    $region10: #{tpu_custom_call.1} parent=1 // pred_check
      _
    $region11: #{tpu_custom_call.1} parent=1 // pred_check_branch
      %38 = sbr.rel (0) target = $region13
    $region12: #{tpu_custom_call.1} parent=1 // pred_region
      _
    $region13: #{tpu_custom_call.1} parent=1 // pred_fallthru
      _
    // Predicated region
    $region14: #{tpu_custom_call.1} parent=1 // pred_check
      _
    $region15: #{tpu_custom_call.1} parent=1 // pred_check_branch
      %40 = sbr.rel (0) target = $region17
    $region16: #{tpu_custom_call.1} parent=1 // pred_region
      %s42 = ssub.s32 256, 256
      %43 = vsyncadd [#allocation6], %s42
      %s44 = sshll.u32 [#allocation7], 4
      %s45 = int_to_ptr.vmem [resolvable:$true] %s44
      %50 = dma.hbm_to_vmem [thread:$0]  %s3, 256, %s45, [#allocation6], 64, 64, 4
    $region17: #{tpu_custom_call.1} parent=1 // pred_fallthru
      _
    // Predicated region
    $region18: #{tpu_custom_call.1} parent=1 // pred_check
      _
    $region19: #{tpu_custom_call.1} parent=1 // pred_check_branch
      %52 = sbr.rel (0) target = $region21
    $region20: #{tpu_custom_call.1} parent=1 // pred_region
      _
    $region21: #{tpu_custom_call.1} parent=1 // pred_fallthru
      _
    // Predicated region
    $region22: #{tpu_custom_call.1} parent=1 // pred_check
      _
    $region23: #{tpu_custom_call.1} parent=1 // pred_check_branch
      %54 = sbr.rel (0) target = $region25
    $region24: #{tpu_custom_call.1} parent=1 // pred_region
      _
    $region25: #{tpu_custom_call.1} parent=1 // pred_fallthru
      _
    // Predicated region
    $region26: #{tpu_custom_call.1} parent=1 // pred_check
      _
    $region27: #{tpu_custom_call.1} parent=1 // pred_check_branch
      %56 = sbr.rel (0) target = $region29
    $region28: #{tpu_custom_call.1} parent=1 // pred_region
      _
    $region29: #{tpu_custom_call.1} parent=1 // pred_fallthru
      _
    // Predicated region
    $region30: #{tpu_custom_call.1} parent=1 // pred_check
      _
    $region31: #{tpu_custom_call.1} parent=1 // pred_check_branch
      %58 = sbr.rel (0) target = $region33
    $region32: #{tpu_custom_call.1} parent=1 // pred_region
      %59 = dma.done [#allocation3], 128
    $region33: #{tpu_custom_call.1} parent=1 // pred_fallthru
      _
    // Predicated region
    $region34: #{tpu_custom_call.1} parent=1 // pred_check
      _
    $region35: #{tpu_custom_call.1} parent=1 // pred_check_branch
      %61 = sbr.rel (0) target = $region37
    $region36: #{tpu_custom_call.1} parent=1 // pred_region
      %62 = dma.done [#allocation6], 128
    $region37: #{tpu_custom_call.1} parent=1 // pred_fallthru
      _
    // Predicated region
    $region38: #{tpu_custom_call.1} parent=1 // pred_check
      _
    $region39: #{tpu_custom_call.1} parent=1 // pred_check_branch
      %64 = sbr.rel (0) target = $region41
    $region40: #{tpu_custom_call.1} parent=1 // pred_region
      %65 = dma.done [#allocation6], 256
    $region41: #{tpu_custom_call.1} parent=1 // pred_fallthru
      _
    %v67 = vld [vmem:[#allocation2] sm:$0xff]
    %v68 = vpack.c.bf16 %v67, %v67
    %v69 = vld [vmem:[#allocation5] sm:$0xf]
    %v70 = vld [vmem:[#allocation5 + $0x4] sm:$0xf]
    %v71 = vld [vmem:[%s2] sm:$0x1]
    %v73 = vlaneseq
    %v74 = vshrl.u32 %v73, 7
    %v75 = vsub.s32 0, %v74
    %v76 = vrot.slane %v71, %v75
    %v80 = vunpack.c.l.b16 %v69
    %v81 = vunpack.c.l.b16 %v70
    %v82 = vpack.c.b16 %v81, %v80
    %vm84 = vcmask 130048
    %v86 = vsel %vm84, %v68, 0
    %88 = vmatprep.subr.bf16.mxu0 0
    %89 = vmatpush1.bf16.msra.mxu0 %v82
    %90 = vmatprep.subr.bf16.mxu0 0
    %91 = vmatpush1.bf16.msra.mxu0 0
    %92 = vmatprep.subr.bf16.mxu0 0
    %93 = vmatpush1.bf16.msra.mxu0 0
    %94 = vmatprep.subr.bf16.mxu0 0
    %95 = vmatpush1.bf16.msra.mxu0 0
    %96 = vmatprep.subr.bf16.mxu0 0
    %97 = vmatpush1.bf16.msra.mxu0 0
    %98 = vmatprep.subr.bf16.mxu0 0
    %99 = vmatpush1.bf16.msra.mxu0 0
    %100 = vmatprep.subr.bf16.mxu0 0
    %101 = vmatpush1.bf16.msra.mxu0 0
    %102 = vmatprep.subr.bf16.mxu0 0
    %103 = vmatpush1.bf16.msra.mxu0 0
    %104 = vmatprep.subr.bf16.mxu0 0
    %105 = vmatpush1.bf16.msra.mxu0 0
    %106 = vmatprep.subr.bf16.mxu0 0
    %107 = vmatpush1.bf16.msra.mxu0 0
    %108 = vmatprep.subr.bf16.mxu0 0
    %109 = vmatpush1.bf16.msra.mxu0 0
    %110 = vmatprep.subr.bf16.mxu0 0
    %111 = vmatpush1.bf16.msra.mxu0 0
    %112 = vmatprep.subr.bf16.mxu0 0
    %113 = vmatpush1.bf16.msra.mxu0 0
    %114 = vmatprep.subr.bf16.mxu0 0
    %115 = vmatpush1.bf16.msra.mxu0 0
    %116 = vmatprep.subr.bf16.mxu0 0
    %117 = vmatpush1.bf16.msra.mxu0 0
    %118 = vmatprep.subr.bf16.mxu0 0
    %119 = vmatpush1.bf16.msra.mxu0 0
    %120 = vmatprep.mubr.bf16.mxu0 0
    %121 = vmatmul.mubr.bf16.gmra.mrb[0].mxu0 %v86
    %v122 = vpop.f32.mrb[0].mxu0
    %v123 = vadd.f32 %v76, %v122
    %v124 = vpop.f32.mrb[0].mxu0
    %v125 = vpop.f32.mrb[0].mxu0
    %v126 = vpop.f32.mrb[0].mxu0
    %127 = vdwg.mxu0
    %v128 = vmax.f32 %v123, 0.0
    %v129 = vpack.c.bf16 %v128, %v128
    %v130 = vld [vmem:[#allocation7] sm:$0xf]
    %v131 = vld [vmem:[#allocation7 + $0x4] sm:$0xf]
    %v132 = vld [vmem:[#allocation7 + $0x8] sm:$0xf]
    %v133 = vld [vmem:[#allocation7 + $0xc] sm:$0xf]
    %v134 = vld [vmem:[%s4] sm:$0x1]
    %v136 = vlaneseq
    %v137 = vshrl.u32 %v136, 7
    %v138 = vsub.s32 0, %v137
    %v139 = vrot.slane %v134, %v138
    %v145 = vunpack.c.l.b16 %v130
    %v146 = vunpack.c.l.b16 %v131
    %v147 = vunpack.c.l.b16 %v132
    %v148 = vunpack.c.l.b16 %v133
    %v149 = vpack.c.b16 %v146, %v145
    %v150 = vpack.c.b16 %v148, %v147
    %vm153 = vcmask 261120
    %v155 = vsel %vm153, %v129, 0
    %157 = vmatprep.subr.bf16.mxu0 0
    %158 = vmatpush1.bf16.msra.mxu0 %v149
    %159 = vmatprep.subr.bf16.mxu0 0
    %160 = vmatpush1.bf16.msra.mxu0 %v150
    %161 = vmatprep.subr.bf16.mxu0 0
    %162 = vmatpush1.bf16.msra.mxu0 0
    %163 = vmatprep.subr.bf16.mxu0 0
    %164 = vmatpush1.bf16.msra.mxu0 0
    %165 = vmatprep.subr.bf16.mxu0 0
    %166 = vmatpush1.bf16.msra.mxu0 0
    %167 = vmatprep.subr.bf16.mxu0 0
    %168 = vmatpush1.bf16.msra.mxu0 0
    %169 = vmatprep.subr.bf16.mxu0 0
    %170 = vmatpush1.bf16.msra.mxu0 0
    %171 = vmatprep.subr.bf16.mxu0 0
    %172 = vmatpush1.bf16.msra.mxu0 0
    %173 = vmatprep.subr.bf16.mxu0 0
    %174 = vmatpush1.bf16.msra.mxu0 0
    %175 = vmatprep.subr.bf16.mxu0 0
    %176 = vmatpush1.bf16.msra.mxu0 0
    %177 = vmatprep.subr.bf16.mxu0 0
    %178 = vmatpush1.bf16.msra.mxu0 0
    %179 = vmatprep.subr.bf16.mxu0 0
    %180 = vmatpush1.bf16.msra.mxu0 0
    %181 = vmatprep.subr.bf16.mxu0 0
    %182 = vmatpush1.bf16.msra.mxu0 0
    %183 = vmatprep.subr.bf16.mxu0 0
    %184 = vmatpush1.bf16.msra.mxu0 0
    %185 = vmatprep.subr.bf16.mxu0 0
    %186 = vmatpush1.bf16.msra.mxu0 0
    %187 = vmatprep.subr.bf16.mxu0 0
    %188 = vmatpush1.bf16.msra.mxu0 0
    %189 = vmatprep.mubr.bf16.mxu0 0
    %190 = vmatmul.mubr.bf16.gmra.mrb[0].mxu0 %v155
    %v191 = vpop.f32.mrb[0].mxu0
    %v192 = vadd.f32 %v139, %v191
    %v193 = vpop.f32.mrb[0].mxu0
    %v194 = vpop.f32.mrb[0].mxu0
    %v195 = vpop.f32.mrb[0].mxu0
    %196 = vdwg.mxu0
    %v197 = vmax.f32 %v192, 0.0
    %v198 = vpack.c.bf16 %v197, %v197
    %v199 = vld [vmem:[%s5] sm:$0xf]
    %v200 = vld [vmem:[%s5 + $0x4] sm:$0xf]
    %v201 = vld [vmem:[%s5 + $0x8] sm:$0xf]
    %v202 = vld [vmem:[%s5 + $0xc] sm:$0xf]
    %v203 = vld [vmem:[%s6] sm:$0x1]
    %v205 = vlaneseq
    %v206 = vshrl.u32 %v205, 7
    %v207 = vsub.s32 0, %v206
    %v208 = vrot.slane %v203, %v207
    %v214 = vunpack.c.l.b16 %v199
    %v215 = vunpack.c.l.b16 %v200
    %v216 = vunpack.c.l.b16 %v201
    %v217 = vunpack.c.l.b16 %v202
    %v218 = vpack.c.b16 %v215, %v214
    %v219 = vpack.c.b16 %v217, %v216
    %v223 = vsel %vm153, %v198, 0
    %225 = vmatprep.subr.bf16.mxu0 0
    %226 = vmatpush1.bf16.msra.mxu0 %v218
    %227 = vmatprep.subr.bf16.mxu0 0
    %228 = vmatpush1.bf16.msra.mxu0 %v219
    %229 = vmatprep.subr.bf16.mxu0 0
    %230 = vmatpush1.bf16.msra.mxu0 0
    %231 = vmatprep.subr.bf16.mxu0 0
    %232 = vmatpush1.bf16.msra.mxu0 0
    %233 = vmatprep.subr.bf16.mxu0 0
    %234 = vmatpush1.bf16.msra.mxu0 0
    %235 = vmatprep.subr.bf16.mxu0 0
    %236 = vmatpush1.bf16.msra.mxu0 0
    %237 = vmatprep.subr.bf16.mxu0 0
    %238 = vmatpush1.bf16.msra.mxu0 0
    %239 = vmatprep.subr.bf16.mxu0 0
    %240 = vmatpush1.bf16.msra.mxu0 0
    %241 = vmatprep.subr.bf16.mxu0 0
    %242 = vmatpush1.bf16.msra.mxu0 0
    %243 = vmatprep.subr.bf16.mxu0 0
    %244 = vmatpush1.bf16.msra.mxu0 0
    %245 = vmatprep.subr.bf16.mxu0 0
    %246 = vmatpush1.bf16.msra.mxu0 0
    %247 = vmatprep.subr.bf16.mxu0 0
    %248 = vmatpush1.bf16.msra.mxu0 0
    %249 = vmatprep.subr.bf16.mxu0 0
    %250 = vmatpush1.bf16.msra.mxu0 0
    %251 = vmatprep.subr.bf16.mxu0 0
    %252 = vmatpush1.bf16.msra.mxu0 0
    %253 = vmatprep.subr.bf16.mxu0 0
    %254 = vmatpush1.bf16.msra.mxu0 0
    %255 = vmatprep.subr.bf16.mxu0 0
    %256 = vmatpush1.bf16.msra.mxu0 0
    %257 = vmatprep.mubr.bf16.mxu0 0
    %258 = vmatmul.mubr.bf16.gmra.mrb[0].mxu0 %v223
    %v259 = vpop.f32.mrb[0].mxu0
    %v260 = vadd.f32 %v208, %v259
    %v261 = vpop.f32.mrb[0].mxu0
    %v262 = vpop.f32.mrb[0].mxu0
    %v263 = vpop.f32.mrb[0].mxu0
    %264 = vdwg.mxu0
    %v265 = vpack.c.bf16 %v260, %v260
    %266 = vst [vmem:[#allocation8] sm:$0xf] %v265
    // Predicated region
    $region42: #{tpu_custom_call.1} parent=1 // pred_check
      _
    $region43: #{tpu_custom_call.1} parent=1 // pred_check_branch
      %268 = sbr.rel (0) target = $region45
    $region44: #{tpu_custom_call.1} parent=1 // pred_region
      %s270 = ssub.s32 64, 64
      %271 = vsyncadd [#allocation4], %s270
      %s273 = sshll.u32 [#allocation8], 4
      %s274 = int_to_ptr.vmem [resolvable:$true] %s273
      %276 = dma.vmem_to_hbm [thread:$0]  %s274, 64, %s7, [#allocation4]
    $region45: #{tpu_custom_call.1} parent=1 // pred_fallthru
      _
    // Predicated region
    $region46: #{tpu_custom_call.1} parent=1 // pred_check
      _
    $region47: #{tpu_custom_call.1} parent=1 // pred_check_branch
      %278 = sbr.rel (0) target = $region49
    $region48: #{tpu_custom_call.1} parent=1 // pred_region
      %279 = dma.done [#allocation4], 64
    $region49: #{tpu_custom_call.1} parent=1 // pred_fallthru
      _
    %280 = vsyncpa [#allocation3], 1
    %281 = vsyncpa [#allocation6], 1
    %282 = vsyncpa [#allocation4], 1

</llo_original>
